<compile_context>
chip_gen: v6e
topology: v6e:2x2x1
jax: 0.10.0
libtpu: 0.0.40
codegen_flags: <defaults>
</compile_context>

<pallas_src>
import jax
import jax.numpy as jnp
from jax import lax
from jax.experimental import pallas as pl
from jax.experimental.pallas import tpu as pltpu


def _vit_embed_kernel(patches_ref, w_ref, addend_ref, out_ref):
    """One batch block per grid step.

    patches_ref : (Bblk, S_pad, K)  im2col patches; row 0 of every batch and
                                    the trailing pad rows are zeros
    w_ref       : (K, D)            pre-transposed Conv2d weight
    addend_ref  : (S_pad, D) f32    row 0 = cls_token + pos[0];
                                    rows 1..S-1 = pos[1:] + conv bias; pad rows 0
    out_ref     : (Bblk, S_pad, D)
    """
    b_blk, s_pad, k = patches_ref.shape
    d = w_ref.shape[1]
    # Single 2D matmul with M = Bblk * S_pad (S_pad is a multiple of 8, so the
    # merge-reshape is layout-free).
    x2d = patches_ref[...].reshape(b_blk * s_pad, k)
    proj = jnp.dot(x2d, w_ref[...], preferred_element_type=jnp.float32)
    proj = proj.reshape(b_blk, s_pad, d)
    # Implicit broadcast of the (S_pad, D) addend over the batch block.
    out_ref[...] = (proj + addend_ref[...]).astype(out_ref.dtype)


def _pick_b_blk(batch, cap):
    """Largest divisor of `batch` that is <= cap and leaves >= 2 grid steps."""
    if batch <= 1:
        return 1
    target = min(cap, max(1, batch // 2))
    for cand in range(target, 0, -1):
        if batch % cand == 0:
            return cand
    return 1


def _default_vmem_limit_bytes():
    # ~3/4 of physical VMEM: ~48 MiB on v7x (64 MiB), ~96 MiB on v5e/v6e (128 MiB).
    try:
        cap = pltpu.get_tpu_info().vmem_capacity_bytes
        return int(min(cap * 3 // 4, 96 * 1024 * 1024))
    except Exception:
        return 48 * 1024 * 1024


def vit_embeddings(x, conv_w, conv_b, cls_token, pos_emb, *, patch_size,
                   b_blk=None, compute_dtype=jnp.bfloat16, out_dtype=None):
    """Pallas ViTEmbeddings forward.

    x        : (B, C, H, W)
    conv_w   : (D, C, P, P)   PyTorch Conv2d weight
    conv_b   : (D,)           PyTorch Conv2d bias
    cls_token: (1, 1, D)
    pos_emb  : (1, N+1, D)
    returns  : (B, N+1, D)
    """
    B, C, H, W = x.shape
    P = patch_size
    D = conv_w.shape[0]
    nH, nW = H // P, W // P
    N = nH * nW
    K = C * P * P
    S = N + 1
    S_pad = ((S + 7) // 8) * 8                     # sublane-align the seq dim
    out_dtype = x.dtype if out_dtype is None else out_dtype

    # --- host-side layout plumbing (fuses into the Pallas input under jit) ---
    # im2col matching PyTorch's (C, kh, kw) per-output-channel flattening.
    patches = x.reshape(B, C, nH, P, nW, P)
    patches = patches.transpose(0, 2, 4, 1, 3, 5)          # (B, nH, nW, C, P, P)
    patches = patches.reshape(B, N, K).astype(compute_dtype)
    # One pad: zero cls row in front + sublane padding at the end.
    patches = jnp.pad(patches, ((0, 0), (1, S_pad - S), (0, 0)))   # (B, S_pad, K)

    # Pre-transposed weight: y = patches @ w_t.
    w_t = conv_w.reshape(D, K).T.astype(compute_dtype)      # (K, D)

    # Fold conv bias + position embeddings (+ cls token on row 0); keep f32.
    pos = pos_emb.reshape(S, D).astype(jnp.float32)
    addend = jnp.concatenate(
        [cls_token.reshape(1, D).astype(jnp.float32) + pos[0:1],
         pos[1:] + conv_b.reshape(1, D).astype(jnp.float32)], axis=0)
    addend = jnp.pad(addend, ((0, S_pad - S), (0, 0)))       # (S_pad, D)

    if b_blk is None:
        cap = 8 if jnp.dtype(compute_dtype) == jnp.dtype(jnp.float32) else 16
        b_blk = _pick_b_blk(B, cap)
    assert B % b_blk == 0, "batch block must divide the batch"

    grid = (B // b_blk,)

    def build(single_buffer_consts):
        const_kw = {}
        if single_buffer_consts:
            # Weight/addend never change across the grid -> single buffer.
            const_kw = dict(pipeline_mode=pl.Buffered(1))
        return pl.pallas_call(
            _vit_embed_kernel,
            out_shape=jax.ShapeDtypeStruct((B, S_pad, D), out_dtype),
            grid=grid,
            in_specs=[
                pl.BlockSpec((b_blk, S_pad, K), lambda b: (b, 0, 0)),  # patches
                pl.BlockSpec((K, D), lambda b: (0, 0), **const_kw),    # weight
                pl.BlockSpec((S_pad, D), lambda b: (0, 0), **const_kw),  # addend
            ],
            out_specs=pl.BlockSpec((b_blk, S_pad, D), lambda b: (b, 0, 0)),
            compiler_params=pltpu.CompilerParams(
                dimension_semantics=("parallel",),
                vmem_limit_bytes=_default_vmem_limit_bytes(),
                allow_input_fusion=[True, False, False],
            ),
        )

    try:
        out = build(True)(patches, w_t, addend)
    except Exception:
        # pipeline_mode=Buffered(1) unsupported on this JAX build: fall back.
        out = build(False)(patches, w_t, addend)

    # Drop the sublane padding rows (pure layout; downstream layers could also
    # consume the padded (B, S_pad, D) slab directly).
    return out[:, :S, :]


def _reference(x, conv_w, conv_b, cls_token, pos_emb, patch_size):
    """Plain-JAX reference mirroring the PyTorch ViTEmbeddings forward."""
    B, C, H, W = x.shape
    D = conv_w.shape[0]
    P = patch_size
    patches = lax.conv_general_dilated(
        x, conv_w, window_strides=(P, P), padding="VALID",
        dimension_numbers=("NCHW", "OIHW", "NCHW"),
        precision=lax.Precision.HIGHEST)
    patches = patches + conv_b.reshape(1, D, 1, 1)
    _, _, nH, nW = patches.shape
    patches = patches.reshape(B, D, nH * nW).transpose(0, 2, 1)   # (B, N, D)
    cls = jnp.broadcast_to(cls_token, (B, 1, D))
    return jnp.concatenate([cls, patches], axis=1) + pos_emb


if __name__ == "__main__":
    # Small config consistent with the module:
    # batch=2, channels=4, image=16x16, patch=4 -> 16 patches, seq=17, hidden=32
    B, C, IMG, PATCH, D = 2, 4, 16, 4, 32
    N = (IMG // PATCH) ** 2
    S = N + 1

    key = jax.random.PRNGKey(0)
    k_x, k_w, k_b, k_cls, k_pos = jax.random.split(key, 5)

    x = jax.random.normal(k_x, (B, C, IMG, IMG), dtype=jnp.float32)
    conv_w = 0.02 * jax.random.normal(k_w, (D, C, PATCH, PATCH), dtype=jnp.float32)
    conv_b = 0.02 * jax.random.normal(k_b, (D,), dtype=jnp.float32)
    cls_token = jax.random.uniform(k_cls, (1, 1, D), dtype=jnp.float32)
    pos_emb = jax.random.uniform(k_pos, (1, S, D), dtype=jnp.float32)

    ref = _reference(x, conv_w, conv_b, cls_token, pos_emb, PATCH)

    # Default (bf16 MXU-fed) path: relaxed tolerance vs the f32 reference.
    out_bf16 = vit_embeddings(x, conv_w, conv_b, cls_token, pos_emb,
                              patch_size=PATCH)
    out_bf16 = jax.block_until_ready(out_bf16)
    assert out_bf16.shape == (B, S, D)
    assert jnp.allclose(out_bf16, ref, atol=2e-2, rtol=2e-2), \
        "bf16 path mismatch vs reference"

    # f32 compute path: same kernel semantics at full input precision.
    # (Tolerance kept moderate to be robust to per-generation matmul-pass
    # precision defaults; any real semantic bug would be orders larger.)
    out_f32 = vit_embeddings(x, conv_w, conv_b, cls_token, pos_emb,
                             patch_size=PATCH, compute_dtype=jnp.float32)
    out_f32 = jax.block_until_ready(out_f32)
    assert out_f32.shape == (B, S, D)
    assert jnp.allclose(out_f32, ref, atol=1e-2, rtol=1e-2), \
        "f32 path mismatch vs reference"

    print("KERNEL_OK")
</pallas_src>

<mosaic_0001>
module attributes {stable_mosaic.version = 11 : i64} {
  func.func @_vit_embed_kernel(%arg0: i32, %arg1: memref<1x24x64xbf16, #tpu.memory_space<vmem>>, %arg2: memref<64x32xbf16, #tpu.memory_space<vmem>>, %arg3: memref<24x32xf32, #tpu.memory_space<vmem>>, %arg4: memref<1x24x32xf32, #tpu.memory_space<vmem>>) attributes {dimension_semantics = [#tpu.dimension_semantics<parallel>], iteration_bounds = array<i64: 2>, scalar_prefetch = 0 : i64, scratch_operands = 0 : i64, tpu.core_type = #tpu.core_type<tc>, window_params = [{transform_indices = @transform_0, window_bounds = array<i64: 1, 24, 64>}, {pipeline_mode = #tpu.pipeline_mode<synchronous>, transform_indices = @transform_1, window_bounds = array<i64: 64, 32>}, {pipeline_mode = #tpu.pipeline_mode<synchronous>, transform_indices = @transform_2, window_bounds = array<i64: 24, 32>}, {transform_indices = @transform_3, window_bounds = array<i64: 1, 24, 32>}]} {
    %c0 = arith.constant 0 : index
    %c0_0 = arith.constant 0 : index
    %c0_1 = arith.constant 0 : index
    %0 = vector.load %arg1[%c0, %c0_0, %c0_1] : memref<1x24x64xbf16, #tpu.memory_space<vmem>>, vector<1x24x64xbf16>
    %1 = vector.shape_cast %0 : vector<1x24x64xbf16> to vector<24x64xbf16>
    %c0_2 = arith.constant 0 : index
    %c0_3 = arith.constant 0 : index
    %2 = vector.load %arg2[%c0_2, %c0_3] : memref<64x32xbf16, #tpu.memory_space<vmem>>, vector<64x32xbf16>
    %cst = arith.constant dense<0.000000e+00> : vector<24x32xf32>
    %3 = tpu.matmul %1, %2, %cst {dimension_numbers = #tpu.dot_dimension_numbers<[1], [0], [0], [1], [0, 0, 1, 1], [], []>} : vector<24x64xbf16>, vector<64x32xbf16>, vector<24x32xf32> -> vector<24x32xf32>
    %4 = vector.shape_cast %3 : vector<24x32xf32> to vector<1x24x32xf32>
    %c0_4 = arith.constant 0 : index
    %c0_5 = arith.constant 0 : index
    %5 = vector.load %arg3[%c0_4, %c0_5] : memref<24x32xf32, #tpu.memory_space<vmem>>, vector<24x32xf32>
    %6 = vector.shape_cast %5 : vector<24x32xf32> to vector<1x24x32xf32>
    %7 = arith.addf %4, %6 : vector<1x24x32xf32>
    %c0_6 = arith.constant 0 : index
    %c0_7 = arith.constant 0 : index
    %c0_8 = arith.constant 0 : index
    %8 = vector.load %arg4[%c0_6, %c0_7, %c0_8] : memref<1x24x32xf32, #tpu.memory_space<vmem>>, vector<1x24x32xf32>
    tpu.vector_store %arg4[%c0_6, %c0_7, %c0_8], %7 {strides = array<i32>} : memref<1x24x32xf32, #tpu.memory_space<vmem>>, vector<1x24x32xf32>,
    return
  }
  func.func @transform_0(%arg0: i32) -> (i32, i32, i32) {
    %c0_i32 = arith.constant 0 : i32
    %c0_i32_0 = arith.constant 0 : i32
    %c0_i32_1 = arith.constant 0 : i32
    return %arg0, %c0_i32, %c0_i32_0 : i32, i32, i32
  }
  func.func @transform_1(%arg0: i32) -> (i32, i32) {
    %c0_i32 = arith.constant 0 : i32
    %c0_i32_0 = arith.constant 0 : i32
    %c0_i32_1 = arith.constant 0 : i32
    return %c0_i32, %c0_i32_0 : i32, i32
  }
  func.func @transform_2(%arg0: i32) -> (i32, i32) {
    %c0_i32 = arith.constant 0 : i32
    %c0_i32_0 = arith.constant 0 : i32
    %c0_i32_1 = arith.constant 0 : i32
    return %c0_i32, %c0_i32_0 : i32, i32
  }
  func.func @transform_3(%arg0: i32) -> (i32, i32, i32) {
    %c0_i32 = arith.constant 0 : i32
    %c0_i32_0 = arith.constant 0 : i32
    %c0_i32_1 = arith.constant 0 : i32
    return %arg0, %c0_i32, %c0_i32_0 : i32, i32, i32
  }
}

module attributes {stable_mosaic.version = 11 : i64} {
  func.func @_vit_embed_kernel(%arg0: i32, %arg1: memref<1x24x64xbf16, #tpu.memory_space<vmem>>, %arg2: memref<64x32xbf16, #tpu.memory_space<vmem>>, %arg3: memref<24x32xf32, #tpu.memory_space<vmem>>, %arg4: memref<1x24x32xf32, #tpu.memory_space<vmem>>) attributes {dimension_semantics = [#tpu.dimension_semantics<parallel>], iteration_bounds = array<i64: 2>, scalar_prefetch = 0 : i64, scratch_operands = 0 : i64, tpu.core_type = #tpu.core_type<tc>, window_params = [{transform_indices = @transform_0, window_bounds = array<i64: 1, 24, 64>}, {pipeline_mode = #tpu.pipeline_mode<synchronous>, transform_indices = @transform_1, window_bounds = array<i64: 64, 32>}, {pipeline_mode = #tpu.pipeline_mode<synchronous>, transform_indices = @transform_2, window_bounds = array<i64: 24, 32>}, {transform_indices = @transform_3, window_bounds = array<i64: 1, 24, 32>}]} {
    %c0 = arith.constant 0 : index
    %c0_0 = arith.constant 0 : index
    %c0_1 = arith.constant 0 : index
    %0 = vector.load %arg1[%c0, %c0_0, %c0_1] : memref<1x24x64xbf16, #tpu.memory_space<vmem>>, vector<1x24x64xbf16>
    %1 = vector.shape_cast %0 : vector<1x24x64xbf16> to vector<24x64xbf16>
    %c0_2 = arith.constant 0 : index
    %c0_3 = arith.constant 0 : index
    %2 = vector.load %arg2[%c0_2, %c0_3] : memref<64x32xbf16, #tpu.memory_space<vmem>>, vector<64x32xbf16>
    %cst = arith.constant dense<0.000000e+00> : vector<24x32xf32>
    %3 = tpu.matmul %1, %2, %cst {dimension_numbers = #tpu.dot_dimension_numbers<[1], [0], [0], [1], [0, 0, 1, 1], [], []>} : vector<24x64xbf16>, vector<64x32xbf16>, vector<24x32xf32> -> vector<24x32xf32>
    %4 = vector.shape_cast %3 : vector<24x32xf32> to vector<1x24x32xf32>
    %c0_4 = arith.constant 0 : index
    %c0_5 = arith.constant 0 : index
    %5 = vector.load %arg3[%c0_4, %c0_5] : memref<24x32xf32, #tpu.memory_space<vmem>>, vector<24x32xf32>
    %6 = vector.shape_cast %5 : vector<24x32xf32> to vector<1x24x32xf32>
    %7 = arith.addf %4, %6 : vector<1x24x32xf32>
    %c0_6 = arith.constant 0 : index
    %c0_7 = arith.constant 0 : index
    %c0_8 = arith.constant 0 : index
    %8 = vector.load %arg4[%c0_6, %c0_7, %c0_8] : memref<1x24x32xf32, #tpu.memory_space<vmem>>, vector<1x24x32xf32>
    tpu.vector_store %arg4[%c0_6, %c0_7, %c0_8], %7 {strides = array<i32>} : memref<1x24x32xf32, #tpu.memory_space<vmem>>, vector<1x24x32xf32>,
    return
  }
  func.func @transform_0(%arg0: i32) -> (i32, i32, i32) {
    %c0_i32 = arith.constant 0 : i32
    %c0_i32_0 = arith.constant 0 : i32
    %c0_i32_1 = arith.constant 0 : i32
    return %arg0, %c0_i32, %c0_i32_0 : i32, i32, i32
  }
  func.func @transform_1(%arg0: i32) -> (i32, i32) {
    %c0_i32 = arith.constant 0 : i32
    %c0_i32_0 = arith.constant 0 : i32
    %c0_i32_1 = arith.constant 0 : i32
    return %c0_i32, %c0_i32_0 : i32, i32
  }
  func.func @transform_2(%arg0: i32) -> (i32, i32) {
    %c0_i32 = arith.constant 0 : i32
    %c0_i32_0 = arith.constant 0 : i32
    %c0_i32_1 = arith.constant 0 : i32
    return %c0_i32, %c0_i32_0 : i32, i32
  }
  func.func @transform_3(%arg0: i32) -> (i32, i32, i32) {
    %c0_i32 = arith.constant 0 : i32
    %c0_i32_0 = arith.constant 0 : i32
    %c0_i32_1 = arith.constant 0 : i32
    return %arg0, %c0_i32, %c0_i32_0 : i32, i32, i32
  }
}

</mosaic_0001>

<llo_original>
// kernel: tpu_custom_call.1
$region0: #{tpu_custom_call.1}
  #allocation0 [shape = 'u32[]', space=smem, size = 0x4, offset = 0x4, fixed_abs, tag = 'smem constant byte address 0x4 - core index']
  #allocation1 [shape = 'u32[144,128]{1,0:T(1,128)}', space=vmem, size = 0x12000, scoped, tag = 'internal scratch']
  %s0 = inlined_call_operand.vmem [shape: bf16[2,24,64], index: 0, kind: input, shape index: {}]
  %s1 = inlined_call_operand.vmem [shape: bf16[64,32], index: 1, kind: input, shape index: {}]
  %s2 = inlined_call_operand.vmem [shape: f32[24,32], index: 2, kind: input, shape index: {}]
  %s3 = inlined_call_operand.hbm [shape: f32[2,24,32], index: 3, kind: output, shape index: {}]
  %s4 = sld [smem:[#allocation0]]
  $region45: #{tpu_custom_call.1} parent=0
    _
  %s6 = ssub.s32 1, %s4
  %s7 = scalar_select 0, %s6, %s4
  $region1: #{tpu_custom_call.1} parent=0
    #allocation2 [shape = 'u8[24576]{0}', space=vmem, size = 0x6000, scoped, tag = 'output window, operand 0']
    #allocation3 [shape = 's32[2]{0}', space=sflag, size = 0x8, scoped, tag = 'scoped memory for tpu_custom_call.1']
    %8 = vsyncpa [#allocation3], 0
    %s9 = scalar_lea.sflag [#allocation3], 1
    %10 = vsyncpa %s9, 0
    loop: start=0, step=1, limit=4
    $region2: #{tpu_custom_call.1} parent=1 // loop_pre_header
      _
    $region3: #{tpu_custom_call.1} parent=1 // loop_header
      %s12 = sphi 0, %s16
      %p13 = scmp.ge.s32.totalorder %s12, 4
      %s22 = sphi 0, %s24
      %s25 = sphi 0, %s22
      %s26 = sphi 0, %s25
      %s42 = sphi 0, %s26
      %s46 = sphi 0, %s46
      %s48 = sphi 0, %s46
      %s49 = sphi 0, %s48
      %s63 = sphi 0, %s49
      %s67 = sphi 0, %s67
      %s69 = sphi 0, %s67
      %s70 = sphi 0, %s69
      %s84 = sphi 0, %s70
      %s90 = sphi 0, %s92
      %s93 = sphi 0, %s90
      %s94 = sphi 0, %s93
      %s110 = sphi 0, %s94
    $region4: #{tpu_custom_call.1} parent=1 // loop_header_branch
      %15 = sbr.rel (%p13) target = $region8
    $region5: #{tpu_custom_call.1} parent=1 // loop_body
      %s17 = ssub.s32 %s12, 1
      %s18 = ssub.s32 %s12, 2
      %s19 = sadd.s32 %s12, 1
      %s20 = ssub.s32 %s12, %s19
      %p21 = scmp.eq.s32.totalorder %s20, 0
      %s23 = sadd.s32 %s22, 1
      %s24 = scalar_select %p21, %s22, %s23
      %p27 = pneg %p21
      %p28 = scmp.eq.s32.totalorder %s12, 1
      %p29 = por %p27, %p28
      %p30 = scmp.ne.s32.totalorder %s22, %s25
      %p31 = scmp.eq.s32.totalorder %s12, 0
      %p32 = por %p30, %p31
      %p33 = scmp.ne.s32.totalorder %s22, %s25
      %p34 = scmp.eq.s32.totalorder %s17, 1
      %p35 = por %p33, %p34
      %p36 = scmp.ne.s32.totalorder %s25, %s26
      %p37 = scmp.eq.s32.totalorder %s17, 0
      %p38 = por %p36, %p37
      %p39 = scmp.ne.s32.totalorder %s25, %s26
      %p40 = scmp.eq.s32.totalorder %s18, 1
      %p41 = por %p39, %p40
      %p43 = scmp.ne.s32.totalorder %s26, %s42
      %p44 = scmp.eq.s32.totalorder %s18, 0
      %p45 = por %p43, %p44
      %s47 = sadd.s32 %s46, 1
      %p50 = scmp.eq.s32.totalorder %s12, 1
      %p51 = scmp.ne.s32.totalorder %s46, %s48
      %p52 = scmp.eq.s32.totalorder %s12, 0
      %p53 = por %p51, %p52
      %p54 = scmp.ne.s32.totalorder %s46, %s48
      %p55 = scmp.eq.s32.totalorder %s17, 1
      %p56 = por %p54, %p55
      %p57 = scmp.ne.s32.totalorder %s48, %s49
      %p58 = scmp.eq.s32.totalorder %s17, 0
      %p59 = por %p57, %p58
      %p60 = scmp.ne.s32.totalorder %s48, %s49
      %p61 = scmp.eq.s32.totalorder %s18, 1
      %p62 = por %p60, %p61
      %p64 = scmp.ne.s32.totalorder %s49, %s63
      %p65 = scmp.eq.s32.totalorder %s18, 0
      %p66 = por %p64, %p65
      %s68 = sadd.s32 %s67, 1
      %p71 = scmp.eq.s32.totalorder %s12, 1
      %p72 = scmp.ne.s32.totalorder %s67, %s69
      %p73 = scmp.eq.s32.totalorder %s12, 0
      %p74 = por %p72, %p73
      %p75 = scmp.ne.s32.totalorder %s67, %s69
      %p76 = scmp.eq.s32.totalorder %s17, 1
      %p77 = por %p75, %p76
      %p78 = scmp.ne.s32.totalorder %s69, %s70
      %p79 = scmp.eq.s32.totalorder %s17, 0
      %p80 = por %p78, %p79
      %p81 = scmp.ne.s32.totalorder %s69, %s70
      %p82 = scmp.eq.s32.totalorder %s18, 1
      %p83 = por %p81, %p82
      %p85 = scmp.ne.s32.totalorder %s70, %s84
      %p86 = scmp.eq.s32.totalorder %s18, 0
      %p87 = por %p85, %p86
      %s88 = ssub.s32 %s12, %s19
      %p89 = scmp.eq.s32.totalorder %s88, 0
      %s91 = sadd.s32 %s90, 1
      %s92 = scalar_select %p89, %s90, %s91
      %p95 = pneg %p89
      %p96 = scmp.eq.s32.totalorder %s12, 1
      %p97 = por %p95, %p96
      %p98 = scmp.ne.s32.totalorder %s90, %s93
      %p99 = scmp.eq.s32.totalorder %s12, 0
      %p100 = por %p98, %p99
      %p101 = scmp.ne.s32.totalorder %s90, %s93
      %p102 = scmp.eq.s32.totalorder %s17, 1
      %p103 = por %p101, %p102
      %p104 = scmp.ne.s32.totalorder %s93, %s94
      %p105 = scmp.eq.s32.totalorder %s17, 0
      %p106 = por %p104, %p105
      %p107 = scmp.ne.s32.totalorder %s93, %s94
      %p108 = scmp.eq.s32.totalorder %s18, 1
      %p109 = por %p107, %p108
      %p111 = scmp.ne.s32.totalorder %s94, %s110
      %p112 = scmp.eq.s32.totalorder %s18, 0
      %p113 = por %p111, %p112
      %p114 = scmp.le.s32.totalorder 1, %s12
      %p115 = scmp.lt.s32.totalorder %s12, 3
      %p116 = pnand %p114, %p115
      %p117 = pneg %p116
      // Predicated region
      $region9: #{tpu_custom_call.1} parent=5 // pred_check
        _
      $region10: #{tpu_custom_call.1} parent=5 // pred_check_branch
        %119 = sbr.rel (%p116) target = $region12
      $region11: #{tpu_custom_call.1} parent=5 // pred_region
        %s120 = ssub.s32 %s12, 1
        // Predicated region
        $region13: #{tpu_custom_call.1} parent=11 // pred_check
          %p121 = pneg %p59
        $region14: #{tpu_custom_call.1} parent=11 // pred_check_branch
          %123 = sbr.rel (%p121) target = $region16
        $region15: #{tpu_custom_call.1} parent=11 // pred_region
          _
        $region16: #{tpu_custom_call.1} parent=11 // pred_fallthru
          _
        // Predicated region
        $region17: #{tpu_custom_call.1} parent=11 // pred_check
          %p124 = pneg %p80
        $region18: #{tpu_custom_call.1} parent=11 // pred_check_branch
          %126 = sbr.rel (%p124) target = $region20
        $region19: #{tpu_custom_call.1} parent=11 // pred_region
          _
        $region20: #{tpu_custom_call.1} parent=11 // pred_fallthru
          _
      $region12: #{tpu_custom_call.1} parent=5 // pred_fallthru
        _
      %p127 = scmp.lt.s32.totalorder %s12, 2
      // Predicated region
      $region21: #{tpu_custom_call.1} parent=5 // pred_check
        %p128 = pneg %p127
      $region22: #{tpu_custom_call.1} parent=5 // pred_check_branch
        %130 = sbr.rel (%p128) target = $region24
      $region23: #{tpu_custom_call.1} parent=5 // pred_region
        // Predicated region
        $region25: #{tpu_custom_call.1} parent=23 // pred_check
          %p131 = pneg %p32
        $region26: #{tpu_custom_call.1} parent=23 // pred_check_branch
          %133 = sbr.rel (%p131) target = $region28
        $region27: #{tpu_custom_call.1} parent=23 // pred_region
          %p134 = scmp.lt.s32.totalorder %s12, 1
          %s135 = scalar_select %p134, %s12, 1
          %s136 = smul.addr %s135, 3
          %s137 = smul.addr %s136, 4
          %s138 = scalar_lea.vmem %s0, %s137
        $region28: #{tpu_custom_call.1} parent=23 // pred_fallthru
          _
      $region24: #{tpu_custom_call.1} parent=5 // pred_fallthru
        _
      %p139 = scmp.le.s32.totalorder 1, %s12
      %p140 = scmp.lt.s32.totalorder %s12, 3
      %p141 = pnand %p139, %p140
      %p142 = pneg %p141
      // Predicated region
      $region29: #{tpu_custom_call.1} parent=5 // pred_check
        _
      $region30: #{tpu_custom_call.1} parent=5 // pred_check_branch
        %144 = sbr.rel (%p141) target = $region32
      $region31: #{tpu_custom_call.1} parent=5 // pred_region
        %s145 = ssub.s32 %s12, 1
        %p146 = scmp.lt.s32.totalorder %s17, 1
        %s147 = scalar_select %p146, %s17, 1
        %s148 = smul.addr %s147, 3
        %s149 = smul.addr %s148, 4
        %s150 = scalar_lea.vmem %s0, %s149
        %p151 = pneg %p38
        %p152 = pneg %p35
        %p153 = pneg %p59
        %p154 = pneg %p56
        %p155 = pneg %p80
        %p156 = pneg %p77
        %p157 = pneg %p106
        %p158 = pneg %p103
        %s159 = sand.u32 %s93, 1
        %s160 = scalar_lea.sflag [#allocation3], %s159
        %s161 = sand.u32 %s93, 1
        %s162 = smul.addr %s161, 24
        %s163 = scalar_lea.vmem [#allocation2], %s162
        %p164 = scmp.lt.s32.totalorder %s17, 1
        %s165 = scalar_select %p164, %s17, 1
        %s166 = smul.addr %s165, 3
        %s167 = smul.addr %s166, 4
        %s168 = scalar_lea.vmem %s0, %s167
        %v170 = vld [vmem:[%s168] sm:$0xf]
        %v171 = vld [vmem:[%s168 + $0x4] sm:$0xf]
        %v172 = vld [vmem:[%s168 + $0x8] sm:$0xf]
        %v173 = vld [vmem:[%s1] sm:$0xf]
        %v174 = vld [vmem:[%s1 + $0x4] sm:$0xf]
        %v175 = vld [vmem:[%s1 + $0x8] sm:$0xf]
        %v176 = vld [vmem:[%s1 + $0xc] sm:$0xf]
        %v177 = vld [vmem:[%s1 + $0x10] sm:$0xf]
        %v178 = vld [vmem:[%s1 + $0x14] sm:$0xf]
        %v179 = vld [vmem:[%s1 + $0x18] sm:$0xf]
        %v180 = vld [vmem:[%s1 + $0x1c] sm:$0xf]
        %v184 = vunpack.c.l.b16 %v170
        %v185 = vunpack.c.l.b16 %v171
        %v186 = vunpack.c.l.b16 %v172
        %v187 = vpack.c.b16 %v185, %v184
        %v188 = vpack.c.b16 %v186, %v186
        %v197 = vunpack.c.l.b16 %v173
        %v198 = vunpack.c.l.b16 %v174
        %v199 = vunpack.c.l.b16 %v175
        %v200 = vunpack.c.l.b16 %v176
        %v201 = vunpack.c.l.b16 %v177
        %v202 = vunpack.c.l.b16 %v178
        %v203 = vunpack.c.l.b16 %v179
        %v204 = vunpack.c.l.b16 %v180
        %v205 = vpack.c.b16 %v198, %v197
        %v206 = vpack.c.b16 %v200, %v199
        %v207 = vpack.c.b16 %v202, %v201
        %v208 = vpack.c.b16 %v204, %v203
        %vm213 = vcmask 523264
        %v215 = vsel %vm213, %v187, 0
        %v218 = vsel %vm213, %v188, 0
        %220 = vmatprep.subr.bf16.mxu0 0
        %221 = vmatpush1.bf16.msra.mxu0 0
        %222 = vmatprep.subr.bf16.mxu0 0
        %223 = vmatpush1.bf16.msra.mxu0 0
        %224 = vmatprep.subr.bf16.mxu0 0
        %225 = vmatpush1.bf16.msra.mxu0 0
        %226 = vmatprep.subr.bf16.mxu0 0
        %227 = vmatpush1.bf16.msra.mxu0 0
        %228 = vmatprep.subr.bf16.mxu0 0
        %229 = vmatpush1.bf16.msra.mxu0 %v208
        %230 = vmatprep.subr.bf16.mxu0 0
        %231 = vmatpush1.bf16.msra.mxu0 %v207
        %232 = vmatprep.subr.bf16.mxu0 0
        %233 = vmatpush1.bf16.msra.mxu0 %v206
        %234 = vmatprep.subr.bf16.mxu0 0
        %235 = vmatpush1.bf16.msra.mxu0 %v205
        %236 = vmatprep.subr.bf16.mxu0 0
        %237 = vmatpush2.bf16.msra.mxu0 0
        %238 = vmatprep.subr.bf16.mxu0 0
        %239 = vmatpush2.bf16.msra.mxu0 0
        %240 = vmatprep.subr.bf16.mxu0 0
        %241 = vmatpush2.bf16.msra.mxu0 0
        %242 = vmatprep.subr.bf16.mxu0 0
        %243 = vmatpush2.bf16.msra.mxu0 0
        %244 = vmatprep.subr.bf16.mxu0 0
        %245 = vmatpush2.bf16.msra.mxu0 0
        %246 = vmatprep.subr.bf16.mxu0 0
        %247 = vmatpush2.bf16.msra.mxu0 0
        %248 = vmatprep.subr.bf16.mxu0 0
        %249 = vmatpush2.bf16.msra.mxu0 0
        %250 = vmatprep.subr.bf16.mxu0 0
        %251 = vmatpush2.bf16.msra.mxu0 0
        %252 = vmatprep.mubr.bf16.mxu0 0
        %253 = vmatmul.mubr.bf16.gmra.mxu0 %v215
        %v254 = vpop.f32.mrf.mxu0
        %v255 = vadd.f32 0.0, %v254
        %v256 = vpop.f32.mrf.mxu0
        %v257 = vpop.f32.mrf.mxu0
        %v258 = vadd.f32 0.0, %v257
        %v259 = vpop.f32.mrf.mxu0
        %260 = vmatprep.mubr.bf16.mxu0 0
        %261 = vmatmul.mubr.bf16.gmra.mxu0 %v218
        %v262 = vpop.f32.mrf.mxu0
        %v263 = vadd.f32 0.0, %v262
        %v264 = vpop.f32.mrf.mxu0
        %v265 = vpop.f32.mrf.mxu0
        %v266 = vpop.f32.mrf.mxu0
        %267 = vdwg.mxu0
        %v268 = vld [vmem:[%s2] sm:$0xff]
        %v269 = vld [vmem:[%s2 + $0x8] sm:$0xff]
        %v270 = vld [vmem:[%s2 + $0x10] sm:$0xff]
        %v271 = vadd.f32 %v255, %v268
        %v272 = vadd.f32 %v258, %v269
        %v273 = vadd.f32 %v263, %v270
        %vm274 = vcmask 261120
        %275 = vst.msk [vmem:[%s163] sm:$0xff] %vm274, %v271
        %276 = vst.msk [vmem:[%s163 + $0x8] sm:$0xff] %vm274, %v272
        %277 = vst.msk [vmem:[%s163 + $0x10] sm:$0xff] %vm274, %v273
        %s278 = sand.u32 %s93, 1
        %s279 = scalar_lea.sflag [#allocation3], %s278
        %s280 = sand.u32 %s93, 1
        %s281 = smul.addr %s280, 24
        %s282 = scalar_lea.vmem [#allocation2], %s281
        // Predicated region
        $region33: #{tpu_custom_call.1} parent=31 // pred_check
          %p283 = pneg %p103
        $region34: #{tpu_custom_call.1} parent=31 // pred_check_branch
          %285 = sbr.rel (%p283) target = $region36
        $region35: #{tpu_custom_call.1} parent=31 // pred_region
          %s287 = ssub.s32 384, 384
          %288 = vsyncadd %s279, %s287
          %s289 = smul.addr %s17, 3
          %s290 = smul.addr %s289, 128
          %s291 = scalar_lea.hbm %s3, %s290
          %s292 = sshll.u32 %s282, 4
          %s293 = int_to_ptr.vmem [resolvable:$true] %s292
          %298 = dma.vmem_to_hbm [thread:$0]  %s293, 384, %s291, %s279, 128, 128, 8
        $region36: #{tpu_custom_call.1} parent=31 // pred_fallthru
          _
      $region32: #{tpu_custom_call.1} parent=5 // pred_fallthru
        _
      %p299 = scmp.le.s32.totalorder 2, %s12
      // Predicated region
      $region37: #{tpu_custom_call.1} parent=5 // pred_check
        %p300 = pneg %p299
      $region38: #{tpu_custom_call.1} parent=5 // pred_check_branch
        %302 = sbr.rel (%p300) target = $region40
      $region39: #{tpu_custom_call.1} parent=5 // pred_region
        %s303 = ssub.s32 %s12, 2
        // Predicated region
        $region41: #{tpu_custom_call.1} parent=39 // pred_check
          %p304 = pneg %p109
        $region42: #{tpu_custom_call.1} parent=39 // pred_check_branch
          %306 = sbr.rel (%p304) target = $region44
        $region43: #{tpu_custom_call.1} parent=39 // pred_region
          %s307 = sand.u32 %s94, 1
          %s308 = scalar_lea.sflag [#allocation3], %s307
          %s309 = sand.u32 %s94, 1
          %s310 = smul.addr %s309, 24
          %s311 = scalar_lea.vmem [#allocation2], %s310
          %312 = dma.done %s308, 384
        $region44: #{tpu_custom_call.1} parent=39 // pred_fallthru
          _
      $region40: #{tpu_custom_call.1} parent=5 // pred_fallthru
        _
    $region6: #{tpu_custom_call.1} parent=1 // loop_footer
      %s16 = sadd.s32 1, %s12
    $region7: #{tpu_custom_call.1} parent=1 // loop_footer_branch
      %11 = sbr.rel target = $region3
    $region8: #{tpu_custom_call.1} parent=1 // loop_exit
      _
    %313 = vsyncpa [#allocation3], 1
    %s314 = scalar_lea.sflag [#allocation3], 1
    %315 = vsyncpa %s314, 1

// kernel: tpu_custom_call.1
$region0: #{tpu_custom_call.1}
  #allocation0 [shape = 'u32[]', space=smem, size = 0x4, offset = 0x4, fixed_abs, tag = 'smem constant byte address 0x4 - core index']
  #allocation1 [shape = 'u32[144,128]{1,0:T(1,128)}', space=vmem, size = 0x12000, scoped, tag = 'internal scratch']
  %s0 = inlined_call_operand.vmem [shape: bf16[2,24,64], index: 0, kind: input, shape index: {}]
  %s1 = inlined_call_operand.vmem [shape: bf16[64,32], index: 1, kind: input, shape index: {}]
  %s2 = inlined_call_operand.vmem [shape: f32[24,32], index: 2, kind: input, shape index: {}]
  %s3 = inlined_call_operand.hbm [shape: f32[2,24,32], index: 3, kind: output, shape index: {}]
  %s4 = sld [smem:[#allocation0]]
  $region45: #{tpu_custom_call.1} parent=0
    _
  %s6 = ssub.s32 1, %s4
  %s7 = scalar_select 0, %s6, %s4
  $region1: #{tpu_custom_call.1} parent=0
    #allocation2 [shape = 'u8[24576]{0}', space=vmem, size = 0x6000, scoped, tag = 'output window, operand 0']
    #allocation3 [shape = 's32[2]{0}', space=sflag, size = 0x8, scoped, tag = 'scoped memory for tpu_custom_call.1']
    %8 = vsyncpa [#allocation3], 0
    %s9 = scalar_lea.sflag [#allocation3], 1
    %10 = vsyncpa %s9, 0
    loop: start=0, step=1, limit=4
    $region2: #{tpu_custom_call.1} parent=1 // loop_pre_header
      _
    $region3: #{tpu_custom_call.1} parent=1 // loop_header
      %s12 = sphi 0, %s16
      %p13 = scmp.ge.s32.totalorder %s12, 4
      %s22 = sphi 0, %s24
      %s25 = sphi 0, %s22
      %s26 = sphi 0, %s25
      %s42 = sphi 0, %s26
      %s46 = sphi 0, %s46
      %s48 = sphi 0, %s46
      %s49 = sphi 0, %s48
      %s63 = sphi 0, %s49
      %s67 = sphi 0, %s67
      %s69 = sphi 0, %s67
      %s70 = sphi 0, %s69
      %s84 = sphi 0, %s70
      %s90 = sphi 0, %s92
      %s93 = sphi 0, %s90
      %s94 = sphi 0, %s93
      %s110 = sphi 0, %s94
    $region4: #{tpu_custom_call.1} parent=1 // loop_header_branch
      %15 = sbr.rel (%p13) target = $region8
    $region5: #{tpu_custom_call.1} parent=1 // loop_body
      %s17 = ssub.s32 %s12, 1
      %s18 = ssub.s32 %s12, 2
      %s19 = sadd.s32 %s12, 1
      %s20 = ssub.s32 %s12, %s19
      %p21 = scmp.eq.s32.totalorder %s20, 0
      %s23 = sadd.s32 %s22, 1
      %s24 = scalar_select %p21, %s22, %s23
      %p27 = pneg %p21
      %p28 = scmp.eq.s32.totalorder %s12, 1
      %p29 = por %p27, %p28
      %p30 = scmp.ne.s32.totalorder %s22, %s25
      %p31 = scmp.eq.s32.totalorder %s12, 0
      %p32 = por %p30, %p31
      %p33 = scmp.ne.s32.totalorder %s22, %s25
      %p34 = scmp.eq.s32.totalorder %s17, 1
      %p35 = por %p33, %p34
      %p36 = scmp.ne.s32.totalorder %s25, %s26
      %p37 = scmp.eq.s32.totalorder %s17, 0
      %p38 = por %p36, %p37
      %p39 = scmp.ne.s32.totalorder %s25, %s26
      %p40 = scmp.eq.s32.totalorder %s18, 1
      %p41 = por %p39, %p40
      %p43 = scmp.ne.s32.totalorder %s26, %s42
      %p44 = scmp.eq.s32.totalorder %s18, 0
      %p45 = por %p43, %p44
      %s47 = sadd.s32 %s46, 1
      %p50 = scmp.eq.s32.totalorder %s12, 1
      %p51 = scmp.ne.s32.totalorder %s46, %s48
      %p52 = scmp.eq.s32.totalorder %s12, 0
      %p53 = por %p51, %p52
      %p54 = scmp.ne.s32.totalorder %s46, %s48
      %p55 = scmp.eq.s32.totalorder %s17, 1
      %p56 = por %p54, %p55
      %p57 = scmp.ne.s32.totalorder %s48, %s49
      %p58 = scmp.eq.s32.totalorder %s17, 0
      %p59 = por %p57, %p58
      %p60 = scmp.ne.s32.totalorder %s48, %s49
      %p61 = scmp.eq.s32.totalorder %s18, 1
      %p62 = por %p60, %p61
      %p64 = scmp.ne.s32.totalorder %s49, %s63
      %p65 = scmp.eq.s32.totalorder %s18, 0
      %p66 = por %p64, %p65
      %s68 = sadd.s32 %s67, 1
      %p71 = scmp.eq.s32.totalorder %s12, 1
      %p72 = scmp.ne.s32.totalorder %s67, %s69
      %p73 = scmp.eq.s32.totalorder %s12, 0
      %p74 = por %p72, %p73
      %p75 = scmp.ne.s32.totalorder %s67, %s69
      %p76 = scmp.eq.s32.totalorder %s17, 1
      %p77 = por %p75, %p76
      %p78 = scmp.ne.s32.totalorder %s69, %s70
      %p79 = scmp.eq.s32.totalorder %s17, 0
      %p80 = por %p78, %p79
      %p81 = scmp.ne.s32.totalorder %s69, %s70
      %p82 = scmp.eq.s32.totalorder %s18, 1
      %p83 = por %p81, %p82
      %p85 = scmp.ne.s32.totalorder %s70, %s84
      %p86 = scmp.eq.s32.totalorder %s18, 0
      %p87 = por %p85, %p86
      %s88 = ssub.s32 %s12, %s19
      %p89 = scmp.eq.s32.totalorder %s88, 0
      %s91 = sadd.s32 %s90, 1
      %s92 = scalar_select %p89, %s90, %s91
      %p95 = pneg %p89
      %p96 = scmp.eq.s32.totalorder %s12, 1
      %p97 = por %p95, %p96
      %p98 = scmp.ne.s32.totalorder %s90, %s93
      %p99 = scmp.eq.s32.totalorder %s12, 0
      %p100 = por %p98, %p99
      %p101 = scmp.ne.s32.totalorder %s90, %s93
      %p102 = scmp.eq.s32.totalorder %s17, 1
      %p103 = por %p101, %p102
      %p104 = scmp.ne.s32.totalorder %s93, %s94
      %p105 = scmp.eq.s32.totalorder %s17, 0
      %p106 = por %p104, %p105
      %p107 = scmp.ne.s32.totalorder %s93, %s94
      %p108 = scmp.eq.s32.totalorder %s18, 1
      %p109 = por %p107, %p108
      %p111 = scmp.ne.s32.totalorder %s94, %s110
      %p112 = scmp.eq.s32.totalorder %s18, 0
      %p113 = por %p111, %p112
      %p114 = scmp.le.s32.totalorder 1, %s12
      %p115 = scmp.lt.s32.totalorder %s12, 3
      %p116 = pnand %p114, %p115
      %p117 = pneg %p116
      // Predicated region
      $region9: #{tpu_custom_call.1} parent=5 // pred_check
        _
      $region10: #{tpu_custom_call.1} parent=5 // pred_check_branch
        %119 = sbr.rel (%p116) target = $region12
      $region11: #{tpu_custom_call.1} parent=5 // pred_region
        %s120 = ssub.s32 %s12, 1
        // Predicated region
        $region13: #{tpu_custom_call.1} parent=11 // pred_check
          %p121 = pneg %p59
        $region14: #{tpu_custom_call.1} parent=11 // pred_check_branch
          %123 = sbr.rel (%p121) target = $region16
        $region15: #{tpu_custom_call.1} parent=11 // pred_region
          _
        $region16: #{tpu_custom_call.1} parent=11 // pred_fallthru
          _
        // Predicated region
        $region17: #{tpu_custom_call.1} parent=11 // pred_check
          %p124 = pneg %p80
        $region18: #{tpu_custom_call.1} parent=11 // pred_check_branch
          %126 = sbr.rel (%p124) target = $region20
        $region19: #{tpu_custom_call.1} parent=11 // pred_region
          _
        $region20: #{tpu_custom_call.1} parent=11 // pred_fallthru
          _
      $region12: #{tpu_custom_call.1} parent=5 // pred_fallthru
        _
      %p127 = scmp.lt.s32.totalorder %s12, 2
      // Predicated region
      $region21: #{tpu_custom_call.1} parent=5 // pred_check
        %p128 = pneg %p127
      $region22: #{tpu_custom_call.1} parent=5 // pred_check_branch
        %130 = sbr.rel (%p128) target = $region24
      $region23: #{tpu_custom_call.1} parent=5 // pred_region
        // Predicated region
        $region25: #{tpu_custom_call.1} parent=23 // pred_check
          %p131 = pneg %p32
        $region26: #{tpu_custom_call.1} parent=23 // pred_check_branch
          %133 = sbr.rel (%p131) target = $region28
        $region27: #{tpu_custom_call.1} parent=23 // pred_region
          %p134 = scmp.lt.s32.totalorder %s12, 1
          %s135 = scalar_select %p134, %s12, 1
          %s136 = smul.addr %s135, 3
          %s137 = smul.addr %s136, 4
          %s138 = scalar_lea.vmem %s0, %s137
        $region28: #{tpu_custom_call.1} parent=23 // pred_fallthru
          _
      $region24: #{tpu_custom_call.1} parent=5 // pred_fallthru
        _
      %p139 = scmp.le.s32.totalorder 1, %s12
      %p140 = scmp.lt.s32.totalorder %s12, 3
      %p141 = pnand %p139, %p140
      %p142 = pneg %p141
      // Predicated region
      $region29: #{tpu_custom_call.1} parent=5 // pred_check
        _
      $region30: #{tpu_custom_call.1} parent=5 // pred_check_branch
        %144 = sbr.rel (%p141) target = $region32
      $region31: #{tpu_custom_call.1} parent=5 // pred_region
        %s145 = ssub.s32 %s12, 1
        %p146 = scmp.lt.s32.totalorder %s17, 1
        %s147 = scalar_select %p146, %s17, 1
        %s148 = smul.addr %s147, 3
        %s149 = smul.addr %s148, 4
        %s150 = scalar_lea.vmem %s0, %s149
        %p151 = pneg %p38
        %p152 = pneg %p35
        %p153 = pneg %p59
        %p154 = pneg %p56
        %p155 = pneg %p80
        %p156 = pneg %p77
        %p157 = pneg %p106
        %p158 = pneg %p103
        %s159 = sand.u32 %s93, 1
        %s160 = scalar_lea.sflag [#allocation3], %s159
        %s161 = sand.u32 %s93, 1
        %s162 = smul.addr %s161, 24
        %s163 = scalar_lea.vmem [#allocation2], %s162
        %p164 = scmp.lt.s32.totalorder %s17, 1
        %s165 = scalar_select %p164, %s17, 1
        %s166 = smul.addr %s165, 3
        %s167 = smul.addr %s166, 4
        %s168 = scalar_lea.vmem %s0, %s167
        %v170 = vld [vmem:[%s168] sm:$0xf]
        %v171 = vld [vmem:[%s168 + $0x4] sm:$0xf]
        %v172 = vld [vmem:[%s168 + $0x8] sm:$0xf]
        %v173 = vld [vmem:[%s1] sm:$0xf]
        %v174 = vld [vmem:[%s1 + $0x4] sm:$0xf]
        %v175 = vld [vmem:[%s1 + $0x8] sm:$0xf]
        %v176 = vld [vmem:[%s1 + $0xc] sm:$0xf]
        %v177 = vld [vmem:[%s1 + $0x10] sm:$0xf]
        %v178 = vld [vmem:[%s1 + $0x14] sm:$0xf]
        %v179 = vld [vmem:[%s1 + $0x18] sm:$0xf]
        %v180 = vld [vmem:[%s1 + $0x1c] sm:$0xf]
        %v184 = vunpack.c.l.b16 %v170
        %v185 = vunpack.c.l.b16 %v171
        %v186 = vunpack.c.l.b16 %v172
        %v187 = vpack.c.b16 %v185, %v184
        %v188 = vpack.c.b16 %v186, %v186
        %v197 = vunpack.c.l.b16 %v173
        %v198 = vunpack.c.l.b16 %v174
        %v199 = vunpack.c.l.b16 %v175
        %v200 = vunpack.c.l.b16 %v176
        %v201 = vunpack.c.l.b16 %v177
        %v202 = vunpack.c.l.b16 %v178
        %v203 = vunpack.c.l.b16 %v179
        %v204 = vunpack.c.l.b16 %v180
        %v205 = vpack.c.b16 %v198, %v197
        %v206 = vpack.c.b16 %v200, %v199
        %v207 = vpack.c.b16 %v202, %v201
        %v208 = vpack.c.b16 %v204, %v203
        %vm213 = vcmask 523264
        %v215 = vsel %vm213, %v187, 0
        %v218 = vsel %vm213, %v188, 0
        %220 = vmatprep.subr.bf16.mxu0 0
        %221 = vmatpush1.bf16.msra.mxu0 0
        %222 = vmatprep.subr.bf16.mxu0 0
        %223 = vmatpush1.bf16.msra.mxu0 0
        %224 = vmatprep.subr.bf16.mxu0 0
        %225 = vmatpush1.bf16.msra.mxu0 0
        %226 = vmatprep.subr.bf16.mxu0 0
        %227 = vmatpush1.bf16.msra.mxu0 0
        %228 = vmatprep.subr.bf16.mxu0 0
        %229 = vmatpush1.bf16.msra.mxu0 %v208
        %230 = vmatprep.subr.bf16.mxu0 0
        %231 = vmatpush1.bf16.msra.mxu0 %v207
        %232 = vmatprep.subr.bf16.mxu0 0
        %233 = vmatpush1.bf16.msra.mxu0 %v206
        %234 = vmatprep.subr.bf16.mxu0 0
        %235 = vmatpush1.bf16.msra.mxu0 %v205
        %236 = vmatprep.subr.bf16.mxu0 0
        %237 = vmatpush2.bf16.msra.mxu0 0
        %238 = vmatprep.subr.bf16.mxu0 0
        %239 = vmatpush2.bf16.msra.mxu0 0
        %240 = vmatprep.subr.bf16.mxu0 0
        %241 = vmatpush2.bf16.msra.mxu0 0
        %242 = vmatprep.subr.bf16.mxu0 0
        %243 = vmatpush2.bf16.msra.mxu0 0
        %244 = vmatprep.subr.bf16.mxu0 0
        %245 = vmatpush2.bf16.msra.mxu0 0
        %246 = vmatprep.subr.bf16.mxu0 0
        %247 = vmatpush2.bf16.msra.mxu0 0
        %248 = vmatprep.subr.bf16.mxu0 0
        %249 = vmatpush2.bf16.msra.mxu0 0
        %250 = vmatprep.subr.bf16.mxu0 0
        %251 = vmatpush2.bf16.msra.mxu0 0
        %252 = vmatprep.mubr.bf16.mxu0 0
        %253 = vmatmul.mubr.bf16.gmra.mxu0 %v215
        %v254 = vpop.f32.mrf.mxu0
        %v255 = vadd.f32 0.0, %v254
        %v256 = vpop.f32.mrf.mxu0
        %v257 = vpop.f32.mrf.mxu0
        %v258 = vadd.f32 0.0, %v257
        %v259 = vpop.f32.mrf.mxu0
        %260 = vmatprep.mubr.bf16.mxu0 0
        %261 = vmatmul.mubr.bf16.gmra.mxu0 %v218
        %v262 = vpop.f32.mrf.mxu0
        %v263 = vadd.f32 0.0, %v262
        %v264 = vpop.f32.mrf.mxu0
        %v265 = vpop.f32.mrf.mxu0
        %v266 = vpop.f32.mrf.mxu0
        %267 = vdwg.mxu0
        %v268 = vld [vmem:[%s2] sm:$0xff]
        %v269 = vld [vmem:[%s2 + $0x8] sm:$0xff]
        %v270 = vld [vmem:[%s2 + $0x10] sm:$0xff]
        %v271 = vadd.f32 %v255, %v268
        %v272 = vadd.f32 %v258, %v269
        %v273 = vadd.f32 %v263, %v270
        %vm274 = vcmask 261120
        %275 = vst.msk [vmem:[%s163] sm:$0xff] %vm274, %v271
        %276 = vst.msk [vmem:[%s163 + $0x8] sm:$0xff] %vm274, %v272
        %277 = vst.msk [vmem:[%s163 + $0x10] sm:$0xff] %vm274, %v273
        %s278 = sand.u32 %s93, 1
        %s279 = scalar_lea.sflag [#allocation3], %s278
        %s280 = sand.u32 %s93, 1
        %s281 = smul.addr %s280, 24
        %s282 = scalar_lea.vmem [#allocation2], %s281
        // Predicated region
        $region33: #{tpu_custom_call.1} parent=31 // pred_check
          %p283 = pneg %p103
        $region34: #{tpu_custom_call.1} parent=31 // pred_check_branch
          %285 = sbr.rel (%p283) target = $region36
        $region35: #{tpu_custom_call.1} parent=31 // pred_region
          %s287 = ssub.s32 384, 384
          %288 = vsyncadd %s279, %s287
          %s289 = smul.addr %s17, 3
          %s290 = smul.addr %s289, 128
          %s291 = scalar_lea.hbm %s3, %s290
          %s292 = sshll.u32 %s282, 4
          %s293 = int_to_ptr.vmem [resolvable:$true] %s292
          %298 = dma.vmem_to_hbm [thread:$0]  %s293, 384, %s291, %s279, 128, 128, 8
        $region36: #{tpu_custom_call.1} parent=31 // pred_fallthru
          _
      $region32: #{tpu_custom_call.1} parent=5 // pred_fallthru
        _
      %p299 = scmp.le.s32.totalorder 2, %s12
      // Predicated region
      $region37: #{tpu_custom_call.1} parent=5 // pred_check
        %p300 = pneg %p299
      $region38: #{tpu_custom_call.1} parent=5 // pred_check_branch
        %302 = sbr.rel (%p300) target = $region40
      $region39: #{tpu_custom_call.1} parent=5 // pred_region
        %s303 = ssub.s32 %s12, 2
        // Predicated region
        $region41: #{tpu_custom_call.1} parent=39 // pred_check
          %p304 = pneg %p109
        $region42: #{tpu_custom_call.1} parent=39 // pred_check_branch
          %306 = sbr.rel (%p304) target = $region44
        $region43: #{tpu_custom_call.1} parent=39 // pred_region
          %s307 = sand.u32 %s94, 1
          %s308 = scalar_lea.sflag [#allocation3], %s307
          %s309 = sand.u32 %s94, 1
          %s310 = smul.addr %s309, 24
          %s311 = scalar_lea.vmem [#allocation2], %s310
          %312 = dma.done %s308, 384
        $region44: #{tpu_custom_call.1} parent=39 // pred_fallthru
          _
      $region40: #{tpu_custom_call.1} parent=5 // pred_fallthru
        _
    $region6: #{tpu_custom_call.1} parent=1 // loop_footer
      %s16 = sadd.s32 1, %s12
    $region7: #{tpu_custom_call.1} parent=1 // loop_footer_branch
      %11 = sbr.rel target = $region3
    $region8: #{tpu_custom_call.1} parent=1 // loop_exit
      _
    %313 = vsyncpa [#allocation3], 1
    %s314 = scalar_lea.sflag [#allocation3], 1
    %315 = vsyncpa %s314, 1

</llo_original>
